<compile_context>
chip_gen: v7x
topology: tpu7x:2x2x1
jax: 0.10.0
libtpu: 0.0.40
codegen_flags: <defaults>
</compile_context>

<pallas_src>
from functools import partial

import jax
import jax.numpy as jnp
from jax.experimental import pallas as pl
from jax.experimental.pallas import tpu as pltpu


# --------------------------------------------------------------------------------------
# Kernel: conv-as-matmul -> bias + ReLU (f32) -> pool (max of two aligned halves) -> FC matmul
# --------------------------------------------------------------------------------------
def simple_cnn_kernel(x_ref, wbig_ref, bbig_ref, wfc_ref, bfc_ref, out_ref):
    """
    x_ref   : (bt, Kp)      matmul dtype  flattened (and zero-padded) input block
    wbig_ref: (Kp, 2*Fp)    matmul dtype  Toeplitz conv weight; columns ordered (s, c, j)
    bbig_ref: (1, 2*Fp)     f32           conv bias broadcast to the same column layout
    wfc_ref : (Fp, NCp)     matmul dtype  FC weight (extra rows/cols are zero)
    bfc_ref : (1, NCp)      f32           FC bias (extra cols zero)
    out_ref : (bt, NCp)     f32           padded logits
    """
    # Conv1d(k=3, stride=1, pad=1) for the whole batch tile as ONE matmul (f32 accumulation).
    conv = jnp.dot(x_ref[...], wbig_ref[...], preferred_element_type=jnp.float32)
    conv = jnp.maximum(conv + bbig_ref[...], 0.0)               # bias + ReLU once, in f32

    # MaxPool1d(kernel=2, stride=2): the two pool partners live in the two lane-aligned halves.
    half = conv.shape[1] // 2
    pooled = jnp.maximum(conv[:, :half], conv[:, half:])        # (bt, Fp), PyTorch flatten order

    # Linear(16*15 -> NC, padded to 128 lanes) as ONE matmul; single full-width store.
    logits = jnp.dot(pooled.astype(wfc_ref.dtype), wfc_ref[...],
                     preferred_element_type=jnp.float32) + bfc_ref[...]
    out_ref[...] = logits.astype(out_ref.dtype)


# --------------------------------------------------------------------------------------
# One-time parameter re-layout (runs at init, NOT per forward call)
# --------------------------------------------------------------------------------------
def prepare_params(w_conv, b_conv, fc_w, fc_b, *, matmul_dtype=jnp.bfloat16):
    """w_conv: (Cout, Cin, K); b_conv: (Cout,); fc_w: (NC, Cout*Lp); fc_b: (NC,)."""
    Cout, Cin, K = w_conv.shape
    NC, F = fc_w.shape
    Lp = F // Cout                        # pooled length (15)
    L = 2 * Lp                            # conv length (30); pad=1 keeps length
    Fh = Cout * Lp                        # real features per pool half (240)
    Fp = -(-Fh // 128) * 128              # lane-aligned half width (256)
    Kin = Cin * L                         # conv contraction dim (120)
    Kp = -(-Kin // 128) * 128             # padded contraction dim (128): dense x loads / MXU K
    NCp = -(-NC // 128) * 128             # padded FC output width (128): unmasked lane-dense store
    pad = (K - 1) // 2

    # Toeplitz weight: rows = input position p (with channel i), cols = conv output position q.
    # T[i, p, c, q] = w_conv[c, i, p - q + pad] when the tap is in range, else 0.
    p = jnp.arange(L)[:, None]
    q = jnp.arange(L)[None, :]
    tap = p - q + pad
    valid = (tap >= 0) & (tap < K)
    tap_c = jnp.clip(tap, 0, K - 1)
    w_ick = jnp.transpose(w_conv, (1, 0, 2)).astype(jnp.float32)   # (Cin, Cout, K)
    T = w_ick[:, :, tap_c]                                         # (Cin, Cout, L, L)  [i, c, p, q]
    T = jnp.where(valid[None, None, :, :], T, 0.0)
    T = jnp.transpose(T, (0, 2, 1, 3))                             # [i, p, c, q]
    # Reorder output columns q = 2j + s -> (s, c, j); pad each half Fh -> Fp lanes.
    T = T.reshape(Cin, L, Cout, Lp, 2)                             # [i, p, c, j, s]
    T = jnp.transpose(T, (0, 1, 4, 2, 3))                          # [i, p, s, c, j]
    T = T.reshape(Kin, 2, Fh)
    w_big = jnp.zeros((Kp, 2, Fp), jnp.float32).at[:Kin, :, :Fh].set(T)
    w_big = w_big.reshape(Kp, 2 * Fp).astype(matmul_dtype)

    # Conv bias in the same (s, c, j) layout (kept f32: bias/ReLU/pool math stays f32).
    bias_half = jnp.zeros((Fp,), jnp.float32).at[:Fh].set(
        jnp.repeat(b_conv.astype(jnp.float32), Lp))
    b_big = jnp.tile(bias_half, 2).reshape(1, 2 * Fp)

    # FC weight (PyTorch flatten order c*Lp + j); rows beyond Fh and cols beyond NC are zero.
    w_fc = jnp.zeros((Fp, NCp), jnp.float32).at[:Fh, :NC].set(fc_w.T.astype(jnp.float32))
    w_fc = w_fc.astype(matmul_dtype)
    b_fc = jnp.zeros((1, NCp), jnp.float32).at[0, :NC].set(fc_b.astype(jnp.float32))
    return w_big, b_big, w_fc, b_fc


# --------------------------------------------------------------------------------------
# Batch-tile heuristic (per perf review)
# --------------------------------------------------------------------------------------
def _pick_batch_tile(batch):
    if batch <= 16:
        return batch                      # one tiny step; nothing worth sharding
    half = -(-batch // 2)                 # ceil(batch/2): >= 2 grid steps (v7x: both TCs busy)
    half = -(-half // 8) * 8              # sublane multiple of 8
    bt = min(512, half)                   # fat tiles amortize the ~600-cycle per-step overhead
    if bt >= 256:
        bt = (bt // 256) * 256            # multiple of 256 to match the 2x256^2 MXU (v6e/v7x)
    return bt


# --------------------------------------------------------------------------------------
# Per-call wrapper: reshape + pad + cast + one pallas_call + output slice
# --------------------------------------------------------------------------------------
@partial(jax.jit, static_argnames=("num_classes",))
def simple_cnn_forward(x, params, *, num_classes):
    """x: (B, Cin, L); params from prepare_params()."""
    w_big, b_big, w_fc, b_fc = params
    B = x.shape[0]
    Fin = x.shape[1] * x.shape[2]         # Cin * L
    Kp = w_big.shape[0]                   # padded contraction dim (128)
    F2 = w_big.shape[1]                   # 2 * Fp (512)
    Fp = w_fc.shape[0]                    # pooled feature width (256)
    NCp = w_fc.shape[1]                   # padded class dim (128)

    x_flat = x.reshape(B, Fin)            # contiguous (metadata-only) reshape
    if Kp != Fin:                         # pad contraction dim 120 -> 128 with zero columns
        x_flat = jnp.pad(x_flat, ((0, 0), (0, Kp - Fin)))
    x_flat = x_flat.astype(w_big.dtype)   # bf16 operands halve streamed x DMA bytes

    bt = _pick_batch_tile(B)
    grid = (pl.cdiv(B, bt),)

    out = pl.pallas_call(
        simple_cnn_kernel,
        out_shape=jax.ShapeDtypeStruct((B, NCp), jnp.float32),
        grid=grid,
        in_specs=[
            pl.BlockSpec((bt, Kp), lambda i: (i, 0)),     # x tile (streamed per step)
            pl.BlockSpec((Kp, F2), lambda i: (0, 0)),     # Toeplitz conv weight (resident)
            pl.BlockSpec((1, F2), lambda i: (0, 0)),      # conv bias (resident)
            pl.BlockSpec((Fp, NCp), lambda i: (0, 0)),    # FC weight (resident)
            pl.BlockSpec((1, NCp), lambda i: (0, 0)),     # FC bias (resident)
        ],
        out_specs=pl.BlockSpec((bt, NCp), lambda i: (i, 0)),
        compiler_params=pltpu.CompilerParams(
            dimension_semantics=("parallel",)),           # batch tiles shard across TCs on v7x
    )(x_flat, w_big, b_big, w_fc, b_fc)
    return out[:, :num_classes]                           # drop the lane padding (free slice)


# --------------------------------------------------------------------------------------
# Pure-JAX reference replicating PyTorch semantics (correctness check only)
# --------------------------------------------------------------------------------------
def reference_forward(x, w_conv, b_conv, fc_w, fc_b):
    B, Cin, L = x.shape
    Cout, _, K = w_conv.shape
    x_pad = jnp.pad(x, ((0, 0), (0, 0), (1, 1)))
    conv = jnp.zeros((B, Cout, L), jnp.float32)
    for k in range(K):
        conv = conv + jnp.einsum('oc,bcl->bol', w_conv[:, :, k], x_pad[:, :, k:k + L],
                                 precision=jax.lax.Precision.HIGHEST)
    conv = conv + b_conv[None, :, None]
    conv = jnp.maximum(conv, 0.0)
    pooled = jnp.max(conv.reshape(B, Cout, L // 2, 2), axis=-1)
    flat = pooled.reshape(B, -1)
    return jnp.dot(flat, fc_w.T, precision=jax.lax.Precision.HIGHEST) + fc_b[None, :]


if __name__ == "__main__":
    B, Cin, L = 2, 4, 30            # L=30 so 16 * (30//2) == 16*15 matches the fc layer
    Cout, K, NC = 16, 3, 10

    key = jax.random.PRNGKey(0)
    kx, kw1, kb1, kw2, kb2 = jax.random.split(key, 5)

    x = jax.random.normal(kx, (B, Cin, L), jnp.float32)

    # deterministic PyTorch-style uniform init (synthetic weights, no checkpoint)
    bound1 = 1.0 / (Cin * K) ** 0.5
    w_conv = jax.random.uniform(kw1, (Cout, Cin, K), jnp.float32, -bound1, bound1)
    b_conv = jax.random.uniform(kb1, (Cout,), jnp.float32, -bound1, bound1)
    fan_in = Cout * (L // 2)
    bound2 = 1.0 / fan_in ** 0.5
    fc_w = jax.random.uniform(kw2, (NC, fan_in), jnp.float32, -bound2, bound2)
    fc_b = jax.random.uniform(kb2, (NC,), jnp.float32, -bound2, bound2)

    ref = reference_forward(x, w_conv, b_conv, fc_w, fc_b)

    # Validate both operand precisions:
    #   f32 operands  -> tight tolerance (MXU multi-pass f32 path)
    #   bf16 operands -> default fast path; reference is f32 HIGHEST, so allow rounding slack
    for mdt, tol in ((jnp.float32, 5e-3), (jnp.bfloat16, 2e-2)):
        params = jax.block_until_ready(
            prepare_params(w_conv, b_conv, fc_w, fc_b, matmul_dtype=mdt))
        out = jax.block_until_ready(simple_cnn_forward(x, params, num_classes=NC))
        assert out.shape == (B, NC), out.shape
        max_err = float(jnp.max(jnp.abs(out - ref)))
        assert max_err <= tol, f"matmul_dtype={mdt}: max abs err = {max_err}"

    print("KERNEL_OK")
</pallas_src>

<mosaic_0001>
module attributes {stable_mosaic.version = 11 : i64} {
  func.func @simple_cnn_kernel(%arg0: i32, %arg1: memref<2x128xf32, #tpu.memory_space<vmem>>, %arg2: memref<128x512xf32, #tpu.memory_space<vmem>>, %arg3: memref<1x512xf32, #tpu.memory_space<vmem>>, %arg4: memref<256x128xf32, #tpu.memory_space<vmem>>, %arg5: memref<1x128xf32, #tpu.memory_space<vmem>>, %arg6: memref<2x128xf32, #tpu.memory_space<vmem>>) attributes {dimension_semantics = [#tpu.dimension_semantics<parallel>], iteration_bounds = array<i64: 1>, scalar_prefetch = 0 : i64, scratch_operands = 0 : i64, tpu.core_type = #tpu.core_type<tc>, window_params = [{transform_indices = @transform_0, window_bounds = array<i64: 2, 128>}, {pipeline_mode = #tpu.pipeline_mode<synchronous>, transform_indices = @transform_1, window_bounds = array<i64: 128, 512>}, {pipeline_mode = #tpu.pipeline_mode<synchronous>, transform_indices = @transform_2, window_bounds = array<i64: 1, 512>}, {pipeline_mode = #tpu.pipeline_mode<synchronous>, transform_indices = @transform_3, window_bounds = array<i64: 256, 128>}, {pipeline_mode = #tpu.pipeline_mode<synchronous>, transform_indices = @transform_4, window_bounds = array<i64: 1, 128>}, {transform_indices = @transform_5, window_bounds = array<i64: 2, 128>}]} {
    %c0 = arith.constant 0 : index
    %c0_0 = arith.constant 0 : index
    %0 = vector.load %arg1[%c0, %c0_0] : memref<2x128xf32, #tpu.memory_space<vmem>>, vector<2x128xf32>
    %c0_1 = arith.constant 0 : index
    %c0_2 = arith.constant 0 : index
    %1 = vector.load %arg2[%c0_1, %c0_2] : memref<128x512xf32, #tpu.memory_space<vmem>>, vector<128x512xf32>
    %cst = arith.constant dense<0.000000e+00> : vector<2x512xf32>
    %2 = tpu.matmul %0, %1, %cst {dimension_numbers = #tpu.dot_dimension_numbers<[1], [0], [0], [1], [0, 0, 1, 1], [], []>} : vector<2x128xf32>, vector<128x512xf32>, vector<2x512xf32> -> vector<2x512xf32>
    %c0_3 = arith.constant 0 : index
    %c0_4 = arith.constant 0 : index
    %3 = vector.load %arg3[%c0_3, %c0_4] : memref<1x512xf32, #tpu.memory_space<vmem>>, vector<1x512xf32>
    %4 = vector.broadcast %3 : vector<1x512xf32> to vector<2x512xf32>
    %5 = arith.addf %2, %4 : vector<2x512xf32>
    %cst_5 = arith.constant 0.000000e+00 : f32
    %6 = vector.broadcast %cst_5 : f32 to vector<2x512xf32>
    %7 = arith.maximumf %5, %6 : vector<2x512xf32>
    %8 = vector.extract_strided_slice %7 {offsets = [0, 0], sizes = [2, 256], strides = [1, 1]} : vector<2x512xf32> to vector<2x256xf32>
    %9 = vector.extract_strided_slice %7 {offsets = [0, 256], sizes = [2, 256], strides = [1, 1]} : vector<2x512xf32> to vector<2x256xf32>
    %10 = arith.maximumf %8, %9 : vector<2x256xf32>
    %c0_6 = arith.constant 0 : index
    %c0_7 = arith.constant 0 : index
    %11 = vector.load %arg4[%c0_6, %c0_7] : memref<256x128xf32, #tpu.memory_space<vmem>>, vector<256x128xf32>
    %cst_8 = arith.constant dense<0.000000e+00> : vector<2x128xf32>
    %12 = tpu.matmul %10, %11, %cst_8 {dimension_numbers = #tpu.dot_dimension_numbers<[1], [0], [0], [1], [0, 0, 1, 1], [], []>} : vector<2x256xf32>, vector<256x128xf32>, vector<2x128xf32> -> vector<2x128xf32>
    %c0_9 = arith.constant 0 : index
    %c0_10 = arith.constant 0 : index
    %13 = vector.load %arg5[%c0_9, %c0_10] : memref<1x128xf32, #tpu.memory_space<vmem>>, vector<1x128xf32>
    %14 = vector.broadcast %13 : vector<1x128xf32> to vector<2x128xf32>
    %15 = arith.addf %12, %14 : vector<2x128xf32>
    %c0_11 = arith.constant 0 : index
    %c0_12 = arith.constant 0 : index
    %16 = vector.load %arg6[%c0_11, %c0_12] : memref<2x128xf32, #tpu.memory_space<vmem>>, vector<2x128xf32>
    tpu.vector_store %arg6[%c0_11, %c0_12], %15 {strides = array<i32>} : memref<2x128xf32, #tpu.memory_space<vmem>>, vector<2x128xf32>,
    return
  }
  func.func @transform_0(%arg0: i32) -> (i32, i32) {
    %c0_i32 = arith.constant 0 : i32
    %c0_i32_0 = arith.constant 0 : i32
    return %arg0, %c0_i32 : i32, i32
  }
  func.func @transform_1(%arg0: i32) -> (i32, i32) {
    %c0_i32 = arith.constant 0 : i32
    %c0_i32_0 = arith.constant 0 : i32
    %c0_i32_1 = arith.constant 0 : i32
    return %c0_i32, %c0_i32_0 : i32, i32
  }
  func.func @transform_2(%arg0: i32) -> (i32, i32) {
    %c0_i32 = arith.constant 0 : i32
    %c0_i32_0 = arith.constant 0 : i32
    %c0_i32_1 = arith.constant 0 : i32
    return %c0_i32, %c0_i32_0 : i32, i32
  }
  func.func @transform_3(%arg0: i32) -> (i32, i32) {
    %c0_i32 = arith.constant 0 : i32
    %c0_i32_0 = arith.constant 0 : i32
    %c0_i32_1 = arith.constant 0 : i32
    return %c0_i32, %c0_i32_0 : i32, i32
  }
  func.func @transform_4(%arg0: i32) -> (i32, i32) {
    %c0_i32 = arith.constant 0 : i32
    %c0_i32_0 = arith.constant 0 : i32
    %c0_i32_1 = arith.constant 0 : i32
    return %c0_i32, %c0_i32_0 : i32, i32
  }
  func.func @transform_5(%arg0: i32) -> (i32, i32) {
    %c0_i32 = arith.constant 0 : i32
    %c0_i32_0 = arith.constant 0 : i32
    return %arg0, %c0_i32 : i32, i32
  }
}

</mosaic_0001>

<llo_original>
// kernel: simple_cnn_forward.1
$region0: #{simple_cnn_forward.1}
  #allocation0 [shape = 'u32[]', space=smem, size = 0x4, offset = 0x4, fixed_abs, tag = 'smem constant byte address 0x4 - core index']
  #allocation1 [shape = 'u32[144,128]{1,0:T(1,128)}', space=vmem, size = 0x12000, scoped, tag = 'internal scratch']
  %s0 = inlined_call_operand.vmem [shape: f32[2,128], index: 0, kind: input, shape index: {}]
  %s1 = inlined_call_operand.hbm [shape: f32[128,512], index: 1, kind: input, shape index: {}]
  %s2 = inlined_call_operand.vmem [shape: f32[1,512], index: 2, kind: input, shape index: {}]
  %s3 = inlined_call_operand.hbm [shape: f32[256,128], index: 3, kind: input, shape index: {}]
  %s4 = inlined_call_operand.vmem [shape: f32[1,128], index: 4, kind: input, shape index: {}]
  %s5 = inlined_call_operand.hbm [shape: f32[2,128], index: 5, kind: output, shape index: {}]
  %s6 = sld [smem:[#allocation0]]
  $region38: #{simple_cnn_forward.1} parent=0
    _
  %s8 = ssub.s32 1, %s6
  %s9 = scalar_select 0, %s8, %s6
  $region1: #{simple_cnn_forward.1} parent=0
    #allocation2 [shape = 'u8[262144]{0}', space=vmem, size = 0x40000, scoped, tag = 'input window, operand 1, single buffered']
    #allocation3 [shape = 's32[1]{0}', space=sflag, size = 0x4, scoped, tag = 'scoped memory for simple_cnn_forward.1']
    #allocation4 [shape = 's32[1]{0}', space=sflag, size = 0x4, scoped, tag = 'scoped memory for simple_cnn_forward.1']
    #allocation5 [shape = 'u8[131072]{0}', space=vmem, size = 0x20000, scoped, tag = 'input window, operand 3, single buffered']
    #allocation6 [shape = 's32[1]{0}', space=sflag, size = 0x4, scoped, tag = 'scoped memory for simple_cnn_forward.1']
    #allocation7 [shape = 'u8[1024]{0}', space=vmem, size = 0x400, scoped, tag = 'output window, operand 0, single buffered']
    %10 = vsyncpa [#allocation3], 0
    %11 = vsyncpa [#allocation6], 0
    %12 = vsyncpa [#allocation4], 0
    // Predicated region
    $region2: #{simple_cnn_forward.1} parent=1 // pred_check
      _
    $region3: #{simple_cnn_forward.1} parent=1 // pred_check_branch
      %14 = sbr.rel (0) target = $region5
    $region4: #{simple_cnn_forward.1} parent=1 // pred_region
      _
    $region5: #{simple_cnn_forward.1} parent=1 // pred_fallthru
      _
    // Predicated region
    $region6: #{simple_cnn_forward.1} parent=1 // pred_check
      _
    $region7: #{simple_cnn_forward.1} parent=1 // pred_check_branch
      %16 = sbr.rel (0) target = $region9
    $region8: #{simple_cnn_forward.1} parent=1 // pred_region
      %s18 = ssub.s32 8192, 8192
      %19 = vsyncadd [#allocation3], %s18
      %s20 = sshll.u32 [#allocation2], 4
      %s21 = int_to_ptr.vmem [resolvable:$true] %s20
      %26 = dma.hbm_to_vmem [thread:$0]  %s1, 8192, %s21, [#allocation3], 512, 512, 32
    $region9: #{simple_cnn_forward.1} parent=1 // pred_fallthru
      _
    // Predicated region
    $region10: #{simple_cnn_forward.1} parent=1 // pred_check
      _
    $region11: #{simple_cnn_forward.1} parent=1 // pred_check_branch
      %28 = sbr.rel (0) target = $region13
    $region12: #{simple_cnn_forward.1} parent=1 // pred_region
      _
    $region13: #{simple_cnn_forward.1} parent=1 // pred_fallthru
      _
    // Predicated region
    $region14: #{simple_cnn_forward.1} parent=1 // pred_check
      _
    $region15: #{simple_cnn_forward.1} parent=1 // pred_check_branch
      %30 = sbr.rel (0) target = $region17
    $region16: #{simple_cnn_forward.1} parent=1 // pred_region
      %s32 = ssub.s32 4096, 4096
      %33 = vsyncadd [#allocation6], %s32
      %s34 = sshll.u32 [#allocation5], 4
      %s35 = int_to_ptr.vmem [resolvable:$true] %s34
      %40 = dma.hbm_to_vmem [thread:$0]  %s3, 4096, %s35, [#allocation6], 128, 128, 8
    $region17: #{simple_cnn_forward.1} parent=1 // pred_fallthru
      _
    // Predicated region
    $region18: #{simple_cnn_forward.1} parent=1 // pred_check
      _
    $region19: #{simple_cnn_forward.1} parent=1 // pred_check_branch
      %42 = sbr.rel (0) target = $region21
    $region20: #{simple_cnn_forward.1} parent=1 // pred_region
      _
    $region21: #{simple_cnn_forward.1} parent=1 // pred_fallthru
      _
    // Predicated region
    $region22: #{simple_cnn_forward.1} parent=1 // pred_check
      _
    $region23: #{simple_cnn_forward.1} parent=1 // pred_check_branch
      %44 = sbr.rel (0) target = $region25
    $region24: #{simple_cnn_forward.1} parent=1 // pred_region
      %45 = dma.done [#allocation3], 8192
    $region25: #{simple_cnn_forward.1} parent=1 // pred_fallthru
      _
    // Predicated region
    $region26: #{simple_cnn_forward.1} parent=1 // pred_check
      _
    $region27: #{simple_cnn_forward.1} parent=1 // pred_check_branch
      %47 = sbr.rel (0) target = $region29
    $region28: #{simple_cnn_forward.1} parent=1 // pred_region
      %48 = dma.done [#allocation6], 4096
    $region29: #{simple_cnn_forward.1} parent=1 // pred_fallthru
      _
    %v49 = vld [vmem:[%s0] sm:$0x3]
    %v50 = vld [vmem:[#allocation2] sm:$0xff]
    %v51 = vld [vmem:[#allocation2 + $0x8] sm:$0xff]
    %v52 = vld [vmem:[#allocation2 + $0x10] sm:$0xff]
    %v53 = vld [vmem:[#allocation2 + $0x18] sm:$0xff]
    %v54 = vld [vmem:[#allocation2 + $0x20] sm:$0xff]
    %v55 = vld [vmem:[#allocation2 + $0x28] sm:$0xff]
    %v56 = vld [vmem:[#allocation2 + $0x30] sm:$0xff]
    %v57 = vld [vmem:[#allocation2 + $0x38] sm:$0xff]
    %v58 = vld [vmem:[#allocation2 + $0x40] sm:$0xff]
    %v59 = vld [vmem:[#allocation2 + $0x48] sm:$0xff]
    %v60 = vld [vmem:[#allocation2 + $0x50] sm:$0xff]
    %v61 = vld [vmem:[#allocation2 + $0x58] sm:$0xff]
    %v62 = vld [vmem:[#allocation2 + $0x60] sm:$0xff]
    %v63 = vld [vmem:[#allocation2 + $0x68] sm:$0xff]
    %v64 = vld [vmem:[#allocation2 + $0x70] sm:$0xff]
    %v65 = vld [vmem:[#allocation2 + $0x78] sm:$0xff]
    %v66 = vld [vmem:[#allocation2 + $0x80] sm:$0xff]
    %v67 = vld [vmem:[#allocation2 + $0x88] sm:$0xff]
    %v68 = vld [vmem:[#allocation2 + $0x90] sm:$0xff]
    %v69 = vld [vmem:[#allocation2 + $0x98] sm:$0xff]
    %v70 = vld [vmem:[#allocation2 + $0xa0] sm:$0xff]
    %v71 = vld [vmem:[#allocation2 + $0xa8] sm:$0xff]
    %v72 = vld [vmem:[#allocation2 + $0xb0] sm:$0xff]
    %v73 = vld [vmem:[#allocation2 + $0xb8] sm:$0xff]
    %v74 = vld [vmem:[#allocation2 + $0xc0] sm:$0xff]
    %v75 = vld [vmem:[#allocation2 + $0xc8] sm:$0xff]
    %v76 = vld [vmem:[#allocation2 + $0xd0] sm:$0xff]
    %v77 = vld [vmem:[#allocation2 + $0xd8] sm:$0xff]
    %v78 = vld [vmem:[#allocation2 + $0xe0] sm:$0xff]
    %v79 = vld [vmem:[#allocation2 + $0xe8] sm:$0xff]
    %v80 = vld [vmem:[#allocation2 + $0xf0] sm:$0xff]
    %v81 = vld [vmem:[#allocation2 + $0xf8] sm:$0xff]
    %v82 = vld [vmem:[#allocation2 + $0x100] sm:$0xff]
    %v83 = vld [vmem:[#allocation2 + $0x108] sm:$0xff]
    %v84 = vld [vmem:[#allocation2 + $0x110] sm:$0xff]
    %v85 = vld [vmem:[#allocation2 + $0x118] sm:$0xff]
    %v86 = vld [vmem:[#allocation2 + $0x120] sm:$0xff]
    %v87 = vld [vmem:[#allocation2 + $0x128] sm:$0xff]
    %v88 = vld [vmem:[#allocation2 + $0x130] sm:$0xff]
    %v89 = vld [vmem:[#allocation2 + $0x138] sm:$0xff]
    %v90 = vld [vmem:[#allocation2 + $0x140] sm:$0xff]
    %v91 = vld [vmem:[#allocation2 + $0x148] sm:$0xff]
    %v92 = vld [vmem:[#allocation2 + $0x150] sm:$0xff]
    %v93 = vld [vmem:[#allocation2 + $0x158] sm:$0xff]
    %v94 = vld [vmem:[#allocation2 + $0x160] sm:$0xff]
    %v95 = vld [vmem:[#allocation2 + $0x168] sm:$0xff]
    %v96 = vld [vmem:[#allocation2 + $0x170] sm:$0xff]
    %v97 = vld [vmem:[#allocation2 + $0x178] sm:$0xff]
    %v98 = vld [vmem:[#allocation2 + $0x180] sm:$0xff]
    %v99 = vld [vmem:[#allocation2 + $0x188] sm:$0xff]
    %v100 = vld [vmem:[#allocation2 + $0x190] sm:$0xff]
    %v101 = vld [vmem:[#allocation2 + $0x198] sm:$0xff]
    %v102 = vld [vmem:[#allocation2 + $0x1a0] sm:$0xff]
    %v103 = vld [vmem:[#allocation2 + $0x1a8] sm:$0xff]
    %v104 = vld [vmem:[#allocation2 + $0x1b0] sm:$0xff]
    %v105 = vld [vmem:[#allocation2 + $0x1b8] sm:$0xff]
    %v106 = vld [vmem:[#allocation2 + $0x1c0] sm:$0xff]
    %v107 = vld [vmem:[#allocation2 + $0x1c8] sm:$0xff]
    %v108 = vld [vmem:[#allocation2 + $0x1d0] sm:$0xff]
    %v109 = vld [vmem:[#allocation2 + $0x1d8] sm:$0xff]
    %v110 = vld [vmem:[#allocation2 + $0x1e0] sm:$0xff]
    %v111 = vld [vmem:[#allocation2 + $0x1e8] sm:$0xff]
    %v112 = vld [vmem:[#allocation2 + $0x1f0] sm:$0xff]
    %v113 = vld [vmem:[#allocation2 + $0x1f8] sm:$0xff]
    %v114 = vld [vmem:[%s2] sm:$0xf]
    %v116 = vlaneseq
    %v117 = vshrl.u32 %v116, 7
    %v118 = vsub.s32 0, %v117
    %v119 = vrot.slane %v114, %v118
    %v120 = vlaneseq
    %v121 = vshrl.u32 %v120, 7
    %v122 = vsub.s32 1, %v121
    %v123 = vrot.slane %v114, %v122
    %v124 = vlaneseq
    %v125 = vshrl.u32 %v124, 7
    %v126 = vsub.s32 2, %v125
    %v127 = vrot.slane %v114, %v126
    %v128 = vlaneseq
    %v129 = vshrl.u32 %v128, 7
    %v130 = vsub.s32 3, %v129
    %v131 = vrot.slane %v114, %v130
    %136 = vmatprep.subr.mxu0 %v51
    %137 = vmatpush1.msra.mxu0 %v50
    %138 = vmatprep.subr.mxu0 %v55
    %139 = vmatpush1.msra.mxu0 %v54
    %140 = vmatprep.subr.mxu0 %v59
    %141 = vmatpush1.msra.mxu0 %v58
    %142 = vmatprep.subr.mxu0 %v63
    %143 = vmatpush1.msra.mxu0 %v62
    %144 = vmatprep.subr.mxu0 %v67
    %145 = vmatpush1.msra.mxu0 %v66
    %146 = vmatprep.subr.mxu0 %v71
    %147 = vmatpush1.msra.mxu0 %v70
    %148 = vmatprep.subr.mxu0 %v75
    %149 = vmatpush1.msra.mxu0 %v74
    %150 = vmatprep.subr.mxu0 %v79
    %151 = vmatpush1.msra.mxu0 %v78
    %152 = vmatprep.subr.mxu0 %v83
    %153 = vmatpush1.msra.mxu0 %v82
    %154 = vmatprep.subr.mxu0 %v87
    %155 = vmatpush1.msra.mxu0 %v86
    %156 = vmatprep.subr.mxu0 %v91
    %157 = vmatpush1.msra.mxu0 %v90
    %158 = vmatprep.subr.mxu0 %v95
    %159 = vmatpush1.msra.mxu0 %v94
    %160 = vmatprep.subr.mxu0 %v99
    %161 = vmatpush1.msra.mxu0 %v98
    %162 = vmatprep.subr.mxu0 %v103
    %163 = vmatpush1.msra.mxu0 %v102
    %164 = vmatprep.subr.mxu0 %v107
    %165 = vmatpush1.msra.mxu0 %v106
    %166 = vmatprep.subr.mxu0 %v111
    %167 = vmatpush1.msra.mxu0 %v110
    %168 = vmatprep.subr.mxu0 0.0
    %169 = vmatpush1.msra.mxu0 0.0
    %170 = vmatprep.subr.mxu0 0.0
    %171 = vmatpush1.msra.mxu0 0.0
    %172 = vmatprep.subr.mxu0 0.0
    %173 = vmatpush1.msra.mxu0 0.0
    %174 = vmatprep.subr.mxu0 0.0
    %175 = vmatpush1.msra.mxu0 0.0
    %176 = vmatprep.subr.mxu0 0.0
    %177 = vmatpush1.msra.mxu0 0.0
    %178 = vmatprep.subr.mxu0 0.0
    %179 = vmatpush1.msra.mxu0 0.0
    %180 = vmatprep.subr.mxu0 0.0
    %181 = vmatpush1.msra.mxu0 0.0
    %182 = vmatprep.subr.mxu0 0.0
    %183 = vmatpush1.msra.mxu0 0.0
    %184 = vmatprep.subr.mxu0 0.0
    %185 = vmatpush1.msra.mxu0 0.0
    %186 = vmatprep.subr.mxu0 0.0
    %187 = vmatpush1.msra.mxu0 0.0
    %188 = vmatprep.subr.mxu0 0.0
    %189 = vmatpush1.msra.mxu0 0.0
    %190 = vmatprep.subr.mxu0 0.0
    %191 = vmatpush1.msra.mxu0 0.0
    %192 = vmatprep.subr.mxu0 0.0
    %193 = vmatpush1.msra.mxu0 0.0
    %194 = vmatprep.subr.mxu0 0.0
    %195 = vmatpush1.msra.mxu0 0.0
    %196 = vmatprep.subr.mxu0 0.0
    %197 = vmatpush1.msra.mxu0 0.0
    %198 = vmatprep.subr.mxu0 0.0
    %199 = vmatpush1.msra.mxu0 0.0
    %200 = vmatprep.mubr.f32.mxu0 0.0
    %201 = vmatmul.mubr.f32.gmra.mrb[0].mxu0 %v49
    %v202 = vpop.f32.mrb[0].mxu0
    %v203 = vadd.f32 %v119, %v202
    %v204 = vpop.f32.mrb[0].mxu0
    %v205 = vadd.f32 %v123, %v204
    %206 = vdwg.mxu0
    %207 = vmatprep.subr.mxu0 %v53
    %208 = vmatpush1.msra.mxu0 %v52
    %209 = vmatprep.subr.mxu0 %v57
    %210 = vmatpush1.msra.mxu0 %v56
    %211 = vmatprep.subr.mxu0 %v61
    %212 = vmatpush1.msra.mxu0 %v60
    %213 = vmatprep.subr.mxu0 %v65
    %214 = vmatpush1.msra.mxu0 %v64
    %215 = vmatprep.subr.mxu0 %v69
    %216 = vmatpush1.msra.mxu0 %v68
    %217 = vmatprep.subr.mxu0 %v73
    %218 = vmatpush1.msra.mxu0 %v72
    %219 = vmatprep.subr.mxu0 %v77
    %220 = vmatpush1.msra.mxu0 %v76
    %221 = vmatprep.subr.mxu0 %v81
    %222 = vmatpush1.msra.mxu0 %v80
    %223 = vmatprep.subr.mxu0 %v85
    %224 = vmatpush1.msra.mxu0 %v84
    %225 = vmatprep.subr.mxu0 %v89
    %226 = vmatpush1.msra.mxu0 %v88
    %227 = vmatprep.subr.mxu0 %v93
    %228 = vmatpush1.msra.mxu0 %v92
    %229 = vmatprep.subr.mxu0 %v97
    %230 = vmatpush1.msra.mxu0 %v96
    %231 = vmatprep.subr.mxu0 %v101
    %232 = vmatpush1.msra.mxu0 %v100
    %233 = vmatprep.subr.mxu0 %v105
    %234 = vmatpush1.msra.mxu0 %v104
    %235 = vmatprep.subr.mxu0 %v109
    %236 = vmatpush1.msra.mxu0 %v108
    %237 = vmatprep.subr.mxu0 %v113
    %238 = vmatpush1.msra.mxu0 %v112
    %239 = vmatprep.subr.mxu0 0.0
    %240 = vmatpush1.msra.mxu0 0.0
    %241 = vmatprep.subr.mxu0 0.0
    %242 = vmatpush1.msra.mxu0 0.0
    %243 = vmatprep.subr.mxu0 0.0
    %244 = vmatpush1.msra.mxu0 0.0
    %245 = vmatprep.subr.mxu0 0.0
    %246 = vmatpush1.msra.mxu0 0.0
    %247 = vmatprep.subr.mxu0 0.0
    %248 = vmatpush1.msra.mxu0 0.0
    %249 = vmatprep.subr.mxu0 0.0
    %250 = vmatpush1.msra.mxu0 0.0
    %251 = vmatprep.subr.mxu0 0.0
    %252 = vmatpush1.msra.mxu0 0.0
    %253 = vmatprep.subr.mxu0 0.0
    %254 = vmatpush1.msra.mxu0 0.0
    %255 = vmatprep.subr.mxu0 0.0
    %256 = vmatpush1.msra.mxu0 0.0
    %257 = vmatprep.subr.mxu0 0.0
    %258 = vmatpush1.msra.mxu0 0.0
    %259 = vmatprep.subr.mxu0 0.0
    %260 = vmatpush1.msra.mxu0 0.0
    %261 = vmatprep.subr.mxu0 0.0
    %262 = vmatpush1.msra.mxu0 0.0
    %263 = vmatprep.subr.mxu0 0.0
    %264 = vmatpush1.msra.mxu0 0.0
    %265 = vmatprep.subr.mxu0 0.0
    %266 = vmatpush1.msra.mxu0 0.0
    %267 = vmatprep.subr.mxu0 0.0
    %268 = vmatpush1.msra.mxu0 0.0
    %269 = vmatprep.subr.mxu0 0.0
    %270 = vmatpush1.msra.mxu0 0.0
    %271 = vmatprep.mubr.f32.mxu0 0.0
    %272 = vmatmul.mubr.f32.gmra.mrb[0].mxu0 %v49
    %v273 = vpop.f32.mrb[0].mxu0
    %v274 = vadd.f32 %v127, %v273
    %v275 = vpop.f32.mrb[0].mxu0
    %v276 = vadd.f32 %v131, %v275
    %277 = vdwg.mxu0
    %v278 = vmax.f32 %v203, 0.0
    %v279 = vmax.f32 %v205, 0.0
    %v280 = vmax.f32 %v274, 0.0
    %v281 = vmax.f32 %v276, 0.0
    %v282 = vmax.f32 %v278, %v280
    %v283 = vmax.f32 %v279, %v281
    %v284 = vld [vmem:[#allocation5] sm:$0xff]
    %v285 = vld [vmem:[#allocation5 + $0x8] sm:$0xff]
    %v286 = vld [vmem:[#allocation5 + $0x10] sm:$0xff]
    %v287 = vld [vmem:[#allocation5 + $0x18] sm:$0xff]
    %v288 = vld [vmem:[#allocation5 + $0x20] sm:$0xff]
    %v289 = vld [vmem:[#allocation5 + $0x28] sm:$0xff]
    %v290 = vld [vmem:[#allocation5 + $0x30] sm:$0xff]
    %v291 = vld [vmem:[#allocation5 + $0x38] sm:$0xff]
    %v292 = vld [vmem:[#allocation5 + $0x40] sm:$0xff]
    %v293 = vld [vmem:[#allocation5 + $0x48] sm:$0xff]
    %v294 = vld [vmem:[#allocation5 + $0x50] sm:$0xff]
    %v295 = vld [vmem:[#allocation5 + $0x58] sm:$0xff]
    %v296 = vld [vmem:[#allocation5 + $0x60] sm:$0xff]
    %v297 = vld [vmem:[#allocation5 + $0x68] sm:$0xff]
    %v298 = vld [vmem:[#allocation5 + $0x70] sm:$0xff]
    %v299 = vld [vmem:[#allocation5 + $0x78] sm:$0xff]
    %v300 = vld [vmem:[#allocation5 + $0x80] sm:$0xff]
    %v301 = vld [vmem:[#allocation5 + $0x88] sm:$0xff]
    %v302 = vld [vmem:[#allocation5 + $0x90] sm:$0xff]
    %v303 = vld [vmem:[#allocation5 + $0x98] sm:$0xff]
    %v304 = vld [vmem:[#allocation5 + $0xa0] sm:$0xff]
    %v305 = vld [vmem:[#allocation5 + $0xa8] sm:$0xff]
    %v306 = vld [vmem:[#allocation5 + $0xb0] sm:$0xff]
    %v307 = vld [vmem:[#allocation5 + $0xb8] sm:$0xff]
    %v308 = vld [vmem:[#allocation5 + $0xc0] sm:$0xff]
    %v309 = vld [vmem:[#allocation5 + $0xc8] sm:$0xff]
    %v310 = vld [vmem:[#allocation5 + $0xd0] sm:$0xff]
    %v311 = vld [vmem:[#allocation5 + $0xd8] sm:$0xff]
    %v312 = vld [vmem:[#allocation5 + $0xe0] sm:$0xff]
    %v313 = vld [vmem:[#allocation5 + $0xe8] sm:$0xff]
    %v314 = vld [vmem:[#allocation5 + $0xf0] sm:$0xff]
    %v315 = vld [vmem:[#allocation5 + $0xf8] sm:$0xff]
    %v316 = vld [vmem:[%s4] sm:$0x1]
    %v318 = vlaneseq
    %v319 = vshrl.u32 %v318, 7
    %v320 = vsub.s32 0, %v319
    %v321 = vrot.slane %v316, %v320
    %323 = vmatprep.subr.mxu0 0.0
    %324 = vmatpush1.msra.mxu0 %v284
    %325 = vmatprep.subr.mxu0 0.0
    %326 = vmatpush1.msra.mxu0 %v285
    %327 = vmatprep.subr.mxu0 0.0
    %328 = vmatpush1.msra.mxu0 %v286
    %329 = vmatprep.subr.mxu0 0.0
    %330 = vmatpush1.msra.mxu0 %v287
    %331 = vmatprep.subr.mxu0 0.0
    %332 = vmatpush1.msra.mxu0 %v288
    %333 = vmatprep.subr.mxu0 0.0
    %334 = vmatpush1.msra.mxu0 %v289
    %335 = vmatprep.subr.mxu0 0.0
    %336 = vmatpush1.msra.mxu0 %v290
    %337 = vmatprep.subr.mxu0 0.0
    %338 = vmatpush1.msra.mxu0 %v291
    %339 = vmatprep.subr.mxu0 0.0
    %340 = vmatpush1.msra.mxu0 %v292
    %341 = vmatprep.subr.mxu0 0.0
    %342 = vmatpush1.msra.mxu0 %v293
    %343 = vmatprep.subr.mxu0 0.0
    %344 = vmatpush1.msra.mxu0 %v294
    %345 = vmatprep.subr.mxu0 0.0
    %346 = vmatpush1.msra.mxu0 %v295
    %347 = vmatprep.subr.mxu0 0.0
    %348 = vmatpush1.msra.mxu0 %v296
    %349 = vmatprep.subr.mxu0 0.0
    %350 = vmatpush1.msra.mxu0 %v297
    %351 = vmatprep.subr.mxu0 0.0
    %352 = vmatpush1.msra.mxu0 %v298
    %353 = vmatprep.subr.mxu0 0.0
    %354 = vmatpush1.msra.mxu0 %v299
    %355 = vmatprep.subr.mxu0 0.0
    %356 = vmatpush1.msra.mxu0 %v300
    %357 = vmatprep.subr.mxu0 0.0
    %358 = vmatpush1.msra.mxu0 %v301
    %359 = vmatprep.subr.mxu0 0.0
    %360 = vmatpush1.msra.mxu0 %v302
    %361 = vmatprep.subr.mxu0 0.0
    %362 = vmatpush1.msra.mxu0 %v303
    %363 = vmatprep.subr.mxu0 0.0
    %364 = vmatpush1.msra.mxu0 %v304
    %365 = vmatprep.subr.mxu0 0.0
    %366 = vmatpush1.msra.mxu0 %v305
    %367 = vmatprep.subr.mxu0 0.0
    %368 = vmatpush1.msra.mxu0 %v306
    %369 = vmatprep.subr.mxu0 0.0
    %370 = vmatpush1.msra.mxu0 %v307
    %371 = vmatprep.subr.mxu0 0.0
    %372 = vmatpush1.msra.mxu0 %v308
    %373 = vmatprep.subr.mxu0 0.0
    %374 = vmatpush1.msra.mxu0 %v309
    %375 = vmatprep.subr.mxu0 0.0
    %376 = vmatpush1.msra.mxu0 %v310
    %377 = vmatprep.subr.mxu0 0.0
    %378 = vmatpush1.msra.mxu0 %v311
    %379 = vmatprep.subr.mxu0 0.0
    %380 = vmatpush1.msra.mxu0 %v312
    %381 = vmatprep.subr.mxu0 0.0
    %382 = vmatpush1.msra.mxu0 %v313
    %383 = vmatprep.subr.mxu0 0.0
    %384 = vmatpush1.msra.mxu0 %v314
    %385 = vmatprep.subr.mxu0 0.0
    %386 = vmatpush1.msra.mxu0 %v315
    %387 = vmatprep.mubr.f32.mxu0 %v283
    %388 = vmatmul.mubr.f32.gmra.mrb[0].mxu0 %v282
    %v389 = vpop.f32.mrb[0].mxu0
    %v390 = vadd.f32 %v321, %v389
    %v391 = vpop.f32.mrb[0].mxu0
    %392 = vdwg.mxu0
    %393 = vst [vmem:[#allocation7] sm:$0x3] %v390
    // Predicated region
    $region30: #{simple_cnn_forward.1} parent=1 // pred_check
      _
    $region31: #{simple_cnn_forward.1} parent=1 // pred_check_branch
      %395 = sbr.rel (0) target = $region33
    $region32: #{simple_cnn_forward.1} parent=1 // pred_region
      %s397 = ssub.s32 32, 32
      %398 = vsyncadd [#allocation4], %s397
      %s400 = sshll.u32 [#allocation7], 4
      %s401 = int_to_ptr.vmem [resolvable:$true] %s400
      %403 = dma.vmem_to_hbm [thread:$0]  %s401, 32, %s5, [#allocation4]
    $region33: #{simple_cnn_forward.1} parent=1 // pred_fallthru
      _
    // Predicated region
    $region34: #{simple_cnn_forward.1} parent=1 // pred_check
      _
    $region35: #{simple_cnn_forward.1} parent=1 // pred_check_branch
      %405 = sbr.rel (0) target = $region37
    $region36: #{simple_cnn_forward.1} parent=1 // pred_region
      %406 = dma.done [#allocation4], 32
    $region37: #{simple_cnn_forward.1} parent=1 // pred_fallthru
      _
    %407 = vsyncpa [#allocation3], 1
    %408 = vsyncpa [#allocation6], 1
    %409 = vsyncpa [#allocation4], 1

</llo_original>
